<compile_context>
chip_gen: v5e
topology: v5e:2x2
jax: 0.10.0
libtpu: 0.0.40
codegen_flags: <defaults>
</compile_context>

<pallas_src>
import functools
import math

import jax
import jax.numpy as jnp
from jax.experimental import pallas as pl
from jax.experimental.pallas import tpu as pltpu

_SUBLANE = 16                       # covers bf16 (16) and f32 (8) sublane packing
_SINGLE_BUFFER_MIN_BYTES = 4 << 20  # only bother single-buffering big weights


def _round_up(x, m):
    return (x + m - 1) // m * m


# ----------------------------------------------------------------------------
# Hardware queries (cached, safe fallbacks).
# ----------------------------------------------------------------------------
@functools.lru_cache(maxsize=None)
def _device_kind():
    try:
        return jax.devices()[0].device_kind.lower()
    except Exception:
        return ""


@functools.lru_cache(maxsize=None)
def _vmem_budget_bytes():
    """~80% of per-core VMEM (headroom for Mosaic internal scratch/semaphores)."""
    cap = None
    try:
        cap = int(pltpu.get_tpu_info().vmem_capacity_bytes)
    except Exception:
        cap = None
    if cap is None or cap <= 0:
        kind = _device_kind()
        # v5e/v6e: 128 MiB per TensorCore; v7x (and unknown): 64 MiB.
        cap = 128 << 20 if ("v5" in kind or "v6" in kind) else 64 << 20
    return int(cap * 0.8)


@functools.lru_cache(maxsize=None)
def _default_act_dtype():
    # v5e has no bf16 VPU/EUP -> keep bias+tanh in f32 there; bf16 elsewhere.
    return jnp.float32 if "v5" in _device_kind() else jnp.bfloat16


@functools.lru_cache(maxsize=None)
def _single_buffer_supported():
    """One-time probe: does pipeline_mode=pl.Buffered(1) lower + compile?"""
    if not hasattr(pl, "Buffered"):
        return False

    def _copy(x_ref, o_ref):
        o_ref[...] = x_ref[...]

    try:
        call = pl.pallas_call(
            _copy,
            out_shape=jax.ShapeDtypeStruct((8, 128), jnp.float32),
            grid=(2,),
            in_specs=[pl.BlockSpec((8, 128), lambda i: (0, 0),
                                   pipeline_mode=pl.Buffered(1))],
            out_specs=pl.BlockSpec((8, 128), lambda i: (0, 0)),
        )
        jax.jit(call).lower(jax.ShapeDtypeStruct((8, 128), jnp.float32)).compile()
        return True
    except Exception:
        return False


def _weight_bytes(in_len, hidden, w_itemsize, b_itemsize):
    return ((in_len * hidden + hidden * hidden + hidden * in_len) * w_itemsize
            + (2 * hidden + in_len) * b_itemsize)


def _want_single_buffer(weight_bytes_one_copy):
    return weight_bytes_one_copy >= _SINGLE_BUFFER_MIN_BYTES


# ----------------------------------------------------------------------------
# Kernel.
# ----------------------------------------------------------------------------
def hnet_kernel(x_ref, w1_ref, b1_ref, w2_ref, b2_ref, w3_ref, b3_ref, o_ref):
    """Fused y = tanh(tanh(tanh(x@W1+b1)@W2+b2)@W3+b3) for one batch tile.

    Matmuls use the weight dtype (bf16 by default) with f32 MXU accumulation.
    Bias add + tanh run in the bias dtype (bf16 on v6e/v7x, f32 on v5e).
    """
    cd = w1_ref.dtype        # matmul operand dtype
    ad = b1_ref.dtype        # activation (bias + tanh) dtype
    h = jnp.dot(x_ref[...], w1_ref[...], preferred_element_type=jnp.float32)
    h = jnp.tanh(h.astype(ad) + b1_ref[...])
    h = jnp.dot(h.astype(cd), w2_ref[...], preferred_element_type=jnp.float32)
    h = jnp.tanh(h.astype(ad) + b2_ref[...])
    y = jnp.dot(h.astype(cd), w3_ref[...], preferred_element_type=jnp.float32)
    o_ref[...] = jnp.tanh(y.astype(ad) + b3_ref[...]).astype(o_ref.dtype)


# ----------------------------------------------------------------------------
# Tiling / pallas_call construction.
# ----------------------------------------------------------------------------
def _choose_block_m(batch, in_len, hidden, x_itemsize, out_itemsize,
                    vmem_budget, resident_weight_bytes):
    batch_rounded = _round_up(batch, _SUBLANE)
    # Per-row VMEM while a tile is in flight: double-buffered x and out tiles
    # plus ~2 live f32 intermediates of width `hidden`.
    per_row = (2 * in_len * x_itemsize + 2 * in_len * out_itemsize
               + 2 * hidden * 4)
    avail = max(vmem_budget - resident_weight_bytes, per_row * _SUBLANE)
    cap = max(_SUBLANE, (avail // per_row) // _SUBLANE * _SUBLANE)
    # 512-1024 rows amortizes the ~0.35 us/step pipeline overhead; tiny batches
    # stay at round_up(B, 16) so we don't DMA/compute zero rows.
    bm = min(batch_rounded, cap, 1024)
    # Prefer >= 2 grid steps once there's enough work to split: shards the
    # batch across v7x's two TensorCores and lets x/out DMAs pipeline.
    if batch >= 256 and bm >= batch_rounded:
        bm = min(bm, _round_up(-(-batch // 2), _SUBLANE))
    return bm


def _build_pallas_call(*, grid_m, block_m, in_len, hidden, out_dtype,
                       vmem_limit_bytes, single_buffer_weights):
    def resident(shape):
        # Weights/biases never change across grid steps; optionally single-
        # buffer them so the second pipeline buffer isn't wasted VMEM.
        if single_buffer_weights:
            return pl.BlockSpec(shape, lambda i: (0, 0),
                                pipeline_mode=pl.Buffered(1))
        return pl.BlockSpec(shape, lambda i: (0, 0))

    return pl.pallas_call(
        hnet_kernel,
        out_shape=jax.ShapeDtypeStruct((grid_m * block_m, in_len), out_dtype),
        grid_spec=pltpu.PrefetchScalarGridSpec(
            num_scalar_prefetch=0,
            grid=(grid_m,),
            in_specs=[
                pl.BlockSpec((block_m, in_len), lambda i: (i, 0)),   # x tile
                resident((in_len, hidden)),                          # w1
                resident((1, hidden)),                               # b1
                resident((hidden, hidden)),                          # w2
                resident((1, hidden)),                               # b2
                resident((hidden, in_len)),                          # w3
                resident((1, in_len)),                               # b3
            ],
            out_specs=pl.BlockSpec((block_m, in_len), lambda i: (i, 0)),
        ),
        compiler_params=pltpu.CompilerParams(
            dimension_semantics=("parallel",),
            vmem_limit_bytes=vmem_limit_bytes,
        ),
    )


# ----------------------------------------------------------------------------
# Public API.
# ----------------------------------------------------------------------------
def prepare_hnet_params(params, *, compute_dtype=jnp.bfloat16, act_dtype=None):
    """One-time conversion of torch-layout params (w: (out, in)) to kernel layout.

    compute_dtype: matmul-operand dtype (bf16 -> MXU with f32 accumulation).
    act_dtype:     bias-add / tanh dtype; defaults to bf16 on v6e/v7x, f32 on v5e.
    Pass compute_dtype=act_dtype=jnp.float32 for full f32 parity (slower).
    """
    if act_dtype is None:
        act_dtype = _default_act_dtype()
    cd, ad = jnp.dtype(compute_dtype), jnp.dtype(act_dtype)
    w1 = jnp.asarray(params["w1"]).T.astype(cd)        # (in_len, hidden)
    w2 = jnp.asarray(params["w2"]).T.astype(cd)        # (hidden, hidden)
    w3 = jnp.asarray(params["w3"]).T.astype(cd)        # (hidden, in_len)
    b1 = jnp.asarray(params["b1"]).reshape(1, -1).astype(ad)
    b2 = jnp.asarray(params["b2"]).reshape(1, -1).astype(ad)
    b3 = jnp.asarray(params["b3"]).reshape(1, -1).astype(ad)
    in_len, hidden = w1.shape
    # Warm the cached Buffered(1) probe outside any jit trace, but only when it
    # would actually be consulted (large resident weights).
    if _want_single_buffer(_weight_bytes(in_len, hidden, cd.itemsize, ad.itemsize)):
        _single_buffer_supported()
    return (w1, b1, w2, b2, w3, b3)


def hnet_forward(x, prepped, *, block_m=None, out_dtype=None):
    """x: (B, in_len). prepped: prepare_hnet_params(...) output. Jit-friendly."""
    w1, b1, w2, b2, w3, b3 = prepped
    B, in_len = x.shape
    in_w, hidden = w1.shape
    assert in_w == in_len, (in_w, in_len)
    cd = jnp.dtype(w1.dtype)
    ad = jnp.dtype(b1.dtype)
    od = jnp.dtype(out_dtype) if out_dtype is not None else jnp.dtype(x.dtype)

    budget = _vmem_budget_bytes()
    wbytes = _weight_bytes(in_len, hidden, cd.itemsize, ad.itemsize)
    single_buffer = _want_single_buffer(wbytes) and _single_buffer_supported()
    weight_bufs = 1 if single_buffer else 2
    if weight_bufs * wbytes > budget:
        # TODO(synk): for very large `hidden`, tile the hidden dim with an
        # 'arbitrary' grid axis over w2/w3 + f32 VMEM accumulator instead of
        # keeping the full weights resident.
        raise NotImplementedError(
            "resident HNet weights exceed the VMEM budget; hidden-dim tiling "
            "is not implemented")

    if block_m is None:
        block_m = _choose_block_m(B, in_len, hidden, cd.itemsize, od.itemsize,
                                  budget, weight_bufs * wbytes)
    B_pad = _round_up(B, block_m)
    grid_m = B_pad // block_m

    # Tight VMEM accounting: resident weights + double-buffered x/out tiles +
    # ~2 live f32 intermediates. Small fixed slack, no 2x hedge, generation-
    # aware ceiling (leaves headroom on v7x's 64 MiB, uses >64 MiB on v5e/v6e
    # when needed).
    need = (weight_bufs * wbytes
            + 2 * block_m * in_len * cd.itemsize
            + 2 * block_m * in_len * od.itemsize
            + 2 * block_m * hidden * 4)
    vmem_limit = int(min(budget, max(need + (2 << 20), 8 << 20)))

    x_p = jnp.pad(x, ((0, B_pad - B), (0, 0))).astype(cd)
    call = _build_pallas_call(grid_m=grid_m, block_m=block_m, in_len=in_len,
                              hidden=hidden, out_dtype=od,
                              vmem_limit_bytes=vmem_limit,
                              single_buffer_weights=single_buffer)
    out_p = call(x_p, w1, b1, w2, b2, w3, b3)
    return out_p[:B]


# ----------------------------------------------------------------------------
# Reference + init (torch-equivalent semantics).
# ----------------------------------------------------------------------------
def init_hnet_params(key, in_len, hidden, dtype=jnp.float32):
    """Deterministic init mimicking nn.Linear's U(-1/sqrt(fan_in), 1/sqrt(fan_in))."""
    k1, k2, k3, k4, k5, k6 = jax.random.split(key, 6)

    def uniform(k, shape, fan_in):
        bound = 1.0 / math.sqrt(fan_in)
        return jax.random.uniform(k, shape, dtype, minval=-bound, maxval=bound)

    return {
        "w1": uniform(k1, (hidden, in_len), in_len),    # torch layout (out, in)
        "b1": uniform(k2, (hidden,), in_len),
        "w2": uniform(k3, (hidden, hidden), hidden),
        "b2": uniform(k4, (hidden,), hidden),
        "w3": uniform(k5, (in_len, hidden), hidden),
        "b3": uniform(k6, (in_len,), hidden),
    }


def hnet_reference(x, p):
    h = jnp.tanh(x @ p["w1"].T + p["b1"])
    h = jnp.tanh(h @ p["w2"].T + p["b2"])
    return jnp.tanh(h @ p["w3"].T + p["b3"])


if __name__ == "__main__":
    key = jax.random.PRNGKey(0)
    kx, kp = jax.random.split(key)

    in_len, hidden = 16, 32
    params = init_hnet_params(kp, in_len, hidden)
    prepped = prepare_hnet_params(params)            # one-time weight prep
    fwd = jax.jit(hnet_forward)                      # jittable forward

    # Small shape from the module spec + a ragged multi-tile batch to exercise
    # batch padding and the >=2-step parallel grid path.
    for batch in (8, 300):
        x = jax.random.normal(kx, (batch, in_len), jnp.float32)
        out = jax.block_until_ready(fwd(x, prepped))
        ref = hnet_reference(x, params)
        assert out.shape == (batch, in_len)
        assert out.dtype == x.dtype
        # bf16 matmul operands (f32 accumulation) + bf16 bias/tanh on v6e/v7x:
        # expected max abs error vs f32 reference is ~1e-2; tanh output in [-1,1].
        err = float(jnp.max(jnp.abs(out - ref)))
        assert err < 3e-2, f"mismatch vs reference at batch={batch}: max abs err {err}"

    print("KERNEL_OK")
</pallas_src>

<mosaic_0001>
module attributes {stable_mosaic.version = 11 : i64} {
  func.func @hnet_kernel(%arg0: i32, %arg1: memref<16x16xbf16, #tpu.memory_space<vmem>>, %arg2: memref<16x32xbf16, #tpu.memory_space<vmem>>, %arg3: memref<1x32xbf16, #tpu.memory_space<vmem>>, %arg4: memref<32x32xbf16, #tpu.memory_space<vmem>>, %arg5: memref<1x32xbf16, #tpu.memory_space<vmem>>, %arg6: memref<32x16xbf16, #tpu.memory_space<vmem>>, %arg7: memref<1x16xbf16, #tpu.memory_space<vmem>>, %arg8: memref<16x16xf32, #tpu.memory_space<vmem>>) attributes {dimension_semantics = [#tpu.dimension_semantics<parallel>], iteration_bounds = array<i64: 1>, scalar_prefetch = 0 : i64, scratch_operands = 0 : i64, tpu.core_type = #tpu.core_type<tc>, window_params = [{transform_indices = @transform_0, window_bounds = array<i64: 16, 16>}, {pipeline_mode = #tpu.pipeline_mode<synchronous>, transform_indices = @transform_1, window_bounds = array<i64: 16, 32>}, {pipeline_mode = #tpu.pipeline_mode<synchronous>, transform_indices = @transform_2, window_bounds = array<i64: 1, 32>}, {pipeline_mode = #tpu.pipeline_mode<synchronous>, transform_indices = @transform_3, window_bounds = array<i64: 32, 32>}, {pipeline_mode = #tpu.pipeline_mode<synchronous>, transform_indices = @transform_4, window_bounds = array<i64: 1, 32>}, {pipeline_mode = #tpu.pipeline_mode<synchronous>, transform_indices = @transform_5, window_bounds = array<i64: 32, 16>}, {pipeline_mode = #tpu.pipeline_mode<synchronous>, transform_indices = @transform_6, window_bounds = array<i64: 1, 16>}, {transform_indices = @transform_7, window_bounds = array<i64: 16, 16>}]} {
    %c0 = arith.constant 0 : index
    %c0_0 = arith.constant 0 : index
    %0 = vector.load %arg1[%c0, %c0_0] : memref<16x16xbf16, #tpu.memory_space<vmem>>, vector<16x16xbf16>
    %c0_1 = arith.constant 0 : index
    %c0_2 = arith.constant 0 : index
    %1 = vector.load %arg2[%c0_1, %c0_2] : memref<16x32xbf16, #tpu.memory_space<vmem>>, vector<16x32xbf16>
    %cst = arith.constant dense<0.000000e+00> : vector<16x32xf32>
    %2 = tpu.matmul %0, %1, %cst {dimension_numbers = #tpu.dot_dimension_numbers<[1], [0], [0], [1], [0, 0, 1, 1], [], []>} : vector<16x16xbf16>, vector<16x32xbf16>, vector<16x32xf32> -> vector<16x32xf32>
    %3 = arith.truncf %2 : vector<16x32xf32> to vector<16x32xbf16>
    %c0_3 = arith.constant 0 : index
    %c0_4 = arith.constant 0 : index
    %4 = vector.load %arg3[%c0_3, %c0_4] : memref<1x32xbf16, #tpu.memory_space<vmem>>, vector<1x32xbf16>
    %5 = vector.broadcast %4 : vector<1x32xbf16> to vector<16x32xbf16>
    %6 = arith.addf %3, %5 : vector<16x32xbf16>
    %7 = math.tanh %6 : vector<16x32xbf16>
    %c0_5 = arith.constant 0 : index
    %c0_6 = arith.constant 0 : index
    %8 = vector.load %arg4[%c0_5, %c0_6] : memref<32x32xbf16, #tpu.memory_space<vmem>>, vector<32x32xbf16>
    %cst_7 = arith.constant dense<0.000000e+00> : vector<16x32xf32>
    %9 = tpu.matmul %7, %8, %cst_7 {dimension_numbers = #tpu.dot_dimension_numbers<[1], [0], [0], [1], [0, 0, 1, 1], [], []>} : vector<16x32xbf16>, vector<32x32xbf16>, vector<16x32xf32> -> vector<16x32xf32>
    %10 = arith.truncf %9 : vector<16x32xf32> to vector<16x32xbf16>
    %c0_8 = arith.constant 0 : index
    %c0_9 = arith.constant 0 : index
    %11 = vector.load %arg5[%c0_8, %c0_9] : memref<1x32xbf16, #tpu.memory_space<vmem>>, vector<1x32xbf16>
    %12 = vector.broadcast %11 : vector<1x32xbf16> to vector<16x32xbf16>
    %13 = arith.addf %10, %12 : vector<16x32xbf16>
    %14 = math.tanh %13 : vector<16x32xbf16>
    %c0_10 = arith.constant 0 : index
    %c0_11 = arith.constant 0 : index
    %15 = vector.load %arg6[%c0_10, %c0_11] : memref<32x16xbf16, #tpu.memory_space<vmem>>, vector<32x16xbf16>
    %cst_12 = arith.constant dense<0.000000e+00> : vector<16x16xf32>
    %16 = tpu.matmul %14, %15, %cst_12 {dimension_numbers = #tpu.dot_dimension_numbers<[1], [0], [0], [1], [0, 0, 1, 1], [], []>} : vector<16x32xbf16>, vector<32x16xbf16>, vector<16x16xf32> -> vector<16x16xf32>
    %17 = arith.truncf %16 : vector<16x16xf32> to vector<16x16xbf16>
    %c0_13 = arith.constant 0 : index
    %c0_14 = arith.constant 0 : index
    %18 = vector.load %arg7[%c0_13, %c0_14] : memref<1x16xbf16, #tpu.memory_space<vmem>>, vector<1x16xbf16>
    %19 = vector.broadcast %18 : vector<1x16xbf16> to vector<16x16xbf16>
    %20 = arith.addf %17, %19 : vector<16x16xbf16>
    %21 = math.tanh %20 : vector<16x16xbf16>
    %22 = arith.extf %21 : vector<16x16xbf16> to vector<16x16xf32>
    %c0_15 = arith.constant 0 : index
    %c0_16 = arith.constant 0 : index
    %23 = vector.load %arg8[%c0_15, %c0_16] : memref<16x16xf32, #tpu.memory_space<vmem>>, vector<16x16xf32>
    tpu.vector_store %arg8[%c0_15, %c0_16], %22 {strides = array<i32>} : memref<16x16xf32, #tpu.memory_space<vmem>>, vector<16x16xf32>,
    return
  }
  func.func @transform_0(%arg0: i32) -> (i32, i32) {
    %c0_i32 = arith.constant 0 : i32
    %c0_i32_0 = arith.constant 0 : i32
    return %arg0, %c0_i32 : i32, i32
  }
  func.func @transform_1(%arg0: i32) -> (i32, i32) {
    %c0_i32 = arith.constant 0 : i32
    %c0_i32_0 = arith.constant 0 : i32
    %c0_i32_1 = arith.constant 0 : i32
    return %c0_i32, %c0_i32_0 : i32, i32
  }
  func.func @transform_2(%arg0: i32) -> (i32, i32) {
    %c0_i32 = arith.constant 0 : i32
    %c0_i32_0 = arith.constant 0 : i32
    %c0_i32_1 = arith.constant 0 : i32
    return %c0_i32, %c0_i32_0 : i32, i32
  }
  func.func @transform_3(%arg0: i32) -> (i32, i32) {
    %c0_i32 = arith.constant 0 : i32
    %c0_i32_0 = arith.constant 0 : i32
    %c0_i32_1 = arith.constant 0 : i32
    return %c0_i32, %c0_i32_0 : i32, i32
  }
  func.func @transform_4(%arg0: i32) -> (i32, i32) {
    %c0_i32 = arith.constant 0 : i32
    %c0_i32_0 = arith.constant 0 : i32
    %c0_i32_1 = arith.constant 0 : i32
    return %c0_i32, %c0_i32_0 : i32, i32
  }
  func.func @transform_5(%arg0: i32) -> (i32, i32) {
    %c0_i32 = arith.constant 0 : i32
    %c0_i32_0 = arith.constant 0 : i32
    %c0_i32_1 = arith.constant 0 : i32
    return %c0_i32, %c0_i32_0 : i32, i32
  }
  func.func @transform_6(%arg0: i32) -> (i32, i32) {
    %c0_i32 = arith.constant 0 : i32
    %c0_i32_0 = arith.constant 0 : i32
    %c0_i32_1 = arith.constant 0 : i32
    return %c0_i32, %c0_i32_0 : i32, i32
  }
  func.func @transform_7(%arg0: i32) -> (i32, i32) {
    %c0_i32 = arith.constant 0 : i32
    %c0_i32_0 = arith.constant 0 : i32
    return %arg0, %c0_i32 : i32, i32
  }
}

</mosaic_0001>

<llo_original>
// kernel: hnet_forward.1
$region0: #{hnet_forward.1}
  #allocation0 [shape = 'u32[]', space=smem, size = 0x4, offset = 0x4, fixed_abs, tag = 'smem constant byte address 0x4 - core index']
  #allocation1 [shape = 'u32[72,128]{1,0:T(1,128)}', space=vmem, size = 0x9000, scoped, tag = 'internal scratch']
  %s0 = inlined_call_operand.vmem [shape: bf16[16,16], index: 0, kind: input, shape index: {}]
  %s1 = inlined_call_operand.vmem [shape: bf16[16,32], index: 1, kind: input, shape index: {}]
  %s2 = inlined_call_operand.vmem [shape: bf16[1,32], index: 2, kind: input, shape index: {}]
  %s3 = inlined_call_operand.vmem [shape: bf16[32,32], index: 3, kind: input, shape index: {}]
  %s4 = inlined_call_operand.vmem [shape: bf16[1,32], index: 4, kind: input, shape index: {}]
  %s5 = inlined_call_operand.vmem [shape: bf16[32,16], index: 5, kind: input, shape index: {}]
  %s6 = inlined_call_operand.vmem [shape: bf16[1,16], index: 6, kind: input, shape index: {}]
  %s7 = inlined_call_operand.vmem [shape: f32[16,16], index: 7, kind: output, shape index: {}]
  %s8 = sld [smem:[#allocation0]]
  $region38: #{hnet_forward.1} parent=0
    _
  %s10 = ssub.s32 1, %s8
  %s11 = scalar_select 0, %s10, %s8
  // Predicated region
  $region2: #{hnet_forward.1} parent=0 // pred_check
    _
  $region3: #{hnet_forward.1} parent=0 // pred_check_branch
    %13 = sbr.rel (0) target = $region5
  $region4: #{hnet_forward.1} parent=0 // pred_region
    _
  $region5: #{hnet_forward.1} parent=0 // pred_fallthru
    _
  // Predicated region
  $region6: #{hnet_forward.1} parent=0 // pred_check
    _
  $region7: #{hnet_forward.1} parent=0 // pred_check_branch
    %15 = sbr.rel (0) target = $region9
  $region8: #{hnet_forward.1} parent=0 // pred_region
    _
  $region9: #{hnet_forward.1} parent=0 // pred_fallthru
    _
  // Predicated region
  $region10: #{hnet_forward.1} parent=0 // pred_check
    _
  $region11: #{hnet_forward.1} parent=0 // pred_check_branch
    %17 = sbr.rel (0) target = $region13
  $region12: #{hnet_forward.1} parent=0 // pred_region
    _
  $region13: #{hnet_forward.1} parent=0 // pred_fallthru
    _
  // Predicated region
  $region14: #{hnet_forward.1} parent=0 // pred_check
    _
  $region15: #{hnet_forward.1} parent=0 // pred_check_branch
    %19 = sbr.rel (0) target = $region17
  $region16: #{hnet_forward.1} parent=0 // pred_region
    _
  $region17: #{hnet_forward.1} parent=0 // pred_fallthru
    _
  // Predicated region
  $region18: #{hnet_forward.1} parent=0 // pred_check
    _
  $region19: #{hnet_forward.1} parent=0 // pred_check_branch
    %21 = sbr.rel (0) target = $region21
  $region20: #{hnet_forward.1} parent=0 // pred_region
    _
  $region21: #{hnet_forward.1} parent=0 // pred_fallthru
    _
  // Predicated region
  $region22: #{hnet_forward.1} parent=0 // pred_check
    _
  $region23: #{hnet_forward.1} parent=0 // pred_check_branch
    %23 = sbr.rel (0) target = $region25
  $region24: #{hnet_forward.1} parent=0 // pred_region
    _
  $region25: #{hnet_forward.1} parent=0 // pred_fallthru
    _
  // Predicated region
  $region26: #{hnet_forward.1} parent=0 // pred_check
    _
  $region27: #{hnet_forward.1} parent=0 // pred_check_branch
    %25 = sbr.rel (0) target = $region29
  $region28: #{hnet_forward.1} parent=0 // pred_region
    _
  $region29: #{hnet_forward.1} parent=0 // pred_fallthru
    _
  %v27 = vld [vmem:[%s0] sm:$0xf]
  %v28 = vld [vmem:[%s0 + $0x4] sm:$0xf]
  %v29 = vld [vmem:[%s1] sm:$0xf]
  %v30 = vld [vmem:[%s1 + $0x4] sm:$0xf]
  %v33 = vunpack.c.l.b16 %v27
  %v34 = vunpack.c.l.b16 %v28
  %v35 = vpack.c.b16 %v34, %v33
  %v38 = vunpack.c.l.b16 %v29
  %v39 = vunpack.c.l.b16 %v30
  %v40 = vpack.c.b16 %v39, %v38
  %vm42 = vcmask 130048
  %v44 = vsel %vm42, %v35, 0
  %46 = vmatpush.bf16.msra.mxu0 0
  %47 = vmatpush.bf16.msra.mxu0 0
  %48 = vmatpush.bf16.msra.mxu0 0
  %49 = vmatpush.bf16.msra.mxu0 0
  %50 = vmatpush.bf16.msra.mxu0 0
  %51 = vmatpush.bf16.msra.mxu0 0
  %52 = vmatpush.bf16.msra.mxu0 0
  %53 = vmatpush.bf16.msra.mxu0 %v40
  %54 = vmatmul.bf16.gmra.mxu0 %v44
  %v55 = vpop.f32.mrf.mxu0
  %v56 = vadd.f32 0.0, %v55
  %v57 = vpop.f32.mrf.mxu0
  %v58 = vadd.f32 0.0, %v57
  %59 = vdwg.mxu0
  %v60 = vpack.c.bf16 %v56, %v56
  %v61 = vpack.c.bf16 %v58, %v58
  %v62 = vld [vmem:[%s2] sm:$0x1]
  %v64 = vpack.i.b16 %v62, %v62
  %v66 = vperm.slane %v64, 0
  %v67 = vunpack.c.l.bf16 %v60
  %v68 = vunpack.c.l.bf16 %v61
  %v69 = vunpack.c.l.bf16 %v66
  %v70 = vadd.f32 %v67, %v69
  %v71 = vadd.f32 %v68, %v69
  %v72 = vpack.c.bf16 %v71, %v70
  %v73 = vunpack.c.l.bf16 %v72
  %v74 = vunpack.c.h.bf16 %v72
  %v75 = vtanh.pop %v73
  %v76 = vtanh.pop %v74
  %v77 = vpack.c.bf16 %v76, %v75
  %v78 = vld [vmem:[%s3] sm:$0xf]
  %v79 = vld [vmem:[%s3 + $0x4] sm:$0xf]
  %v80 = vld [vmem:[%s3 + $0x8] sm:$0xf]
  %v81 = vld [vmem:[%s3 + $0xc] sm:$0xf]
  %v86 = vunpack.c.l.b16 %v78
  %v87 = vunpack.c.l.b16 %v79
  %v88 = vunpack.c.l.b16 %v80
  %v89 = vunpack.c.l.b16 %v81
  %v90 = vpack.c.b16 %v87, %v86
  %v91 = vpack.c.b16 %v89, %v88
  %vm94 = vcmask 261120
  %v96 = vsel %vm94, %v77, 0
  %98 = vmatpush.bf16.msra.mxu0 0
  %99 = vmatpush.bf16.msra.mxu0 0
  %100 = vmatpush.bf16.msra.mxu0 0
  %101 = vmatpush.bf16.msra.mxu0 0
  %102 = vmatpush.bf16.msra.mxu0 0
  %103 = vmatpush.bf16.msra.mxu0 0
  %104 = vmatpush.bf16.msra.mxu0 %v91
  %105 = vmatpush.bf16.msra.mxu0 %v90
  %106 = vmatmul.bf16.gmra.mxu0 %v96
  %v107 = vpop.f32.mrf.mxu0
  %v108 = vadd.f32 0.0, %v107
  %v109 = vpop.f32.mrf.mxu0
  %v110 = vadd.f32 0.0, %v109
  %111 = vdwg.mxu0
  %v112 = vpack.c.bf16 %v108, %v108
  %v113 = vpack.c.bf16 %v110, %v110
  %v114 = vld [vmem:[%s4] sm:$0x1]
  %v116 = vpack.i.b16 %v114, %v114
  %v118 = vperm.slane %v116, 0
  %v119 = vunpack.c.l.bf16 %v112
  %v120 = vunpack.c.l.bf16 %v113
  %v121 = vunpack.c.l.bf16 %v118
  %v122 = vadd.f32 %v119, %v121
  %v123 = vadd.f32 %v120, %v121
  %v124 = vpack.c.bf16 %v123, %v122
  %v125 = vunpack.c.l.bf16 %v124
  %v126 = vunpack.c.h.bf16 %v124
  %v127 = vtanh.pop %v125
  %v128 = vtanh.pop %v126
  %v129 = vpack.c.bf16 %v128, %v127
  %v130 = vld [vmem:[%s5] sm:$0xf]
  %v131 = vld [vmem:[%s5 + $0x4] sm:$0xf]
  %v132 = vld [vmem:[%s5 + $0x8] sm:$0xf]
  %v133 = vld [vmem:[%s5 + $0xc] sm:$0xf]
  %v138 = vunpack.c.l.b16 %v130
  %v139 = vunpack.c.l.b16 %v131
  %v140 = vunpack.c.l.b16 %v132
  %v141 = vunpack.c.l.b16 %v133
  %v142 = vpack.c.b16 %v139, %v138
  %v143 = vpack.c.b16 %v141, %v140
  %v147 = vsel %vm94, %v129, 0
  %149 = vmatpush.bf16.msra.mxu0 0
  %150 = vmatpush.bf16.msra.mxu0 0
  %151 = vmatpush.bf16.msra.mxu0 0
  %152 = vmatpush.bf16.msra.mxu0 0
  %153 = vmatpush.bf16.msra.mxu0 0
  %154 = vmatpush.bf16.msra.mxu0 0
  %155 = vmatpush.bf16.msra.mxu0 %v143
  %156 = vmatpush.bf16.msra.mxu0 %v142
  %157 = vmatmul.bf16.gmra.mxu0 %v147
  %v158 = vpop.f32.mrf.mxu0
  %v159 = vadd.f32 0.0, %v158
  %v160 = vpop.f32.mrf.mxu0
  %v161 = vadd.f32 0.0, %v160
  %162 = vdwg.mxu0
  %v163 = vpack.c.bf16 %v159, %v159
  %v164 = vpack.c.bf16 %v161, %v161
  %v165 = vld [vmem:[%s6] sm:$0x1]
  %v167 = vpack.i.b16 %v165, %v165
  %v169 = vperm.slane %v167, 0
  %v170 = vunpack.c.l.bf16 %v163
  %v171 = vunpack.c.l.bf16 %v164
  %v172 = vunpack.c.l.bf16 %v169
  %v173 = vadd.f32 %v170, %v172
  %v174 = vadd.f32 %v171, %v172
  %v175 = vpack.c.bf16 %v173, %v173
  %v176 = vpack.c.bf16 %v174, %v174
  %v177 = vunpack.c.l.bf16 %v175
  %v178 = vunpack.c.l.bf16 %v176
  %v179 = vtanh.pop %v177
  %v180 = vtanh.pop %v178
  %v181 = vpack.c.bf16 %v179, %v179
  %v182 = vpack.c.bf16 %v180, %v180
  %v183 = vunpack.c.l.bf16 %v181
  %v184 = vunpack.c.l.bf16 %v182
  %185 = vst.msk [vmem:[%s7] sm:$0xff] %vm42, %v183
  %186 = vst.msk [vmem:[%s7 + $0x8] sm:$0xff] %vm42, %v184
  // Predicated region
  $region30: #{hnet_forward.1} parent=0 // pred_check
    _
  $region31: #{hnet_forward.1} parent=0 // pred_check_branch
    %188 = sbr.rel (0) target = $region33
  $region32: #{hnet_forward.1} parent=0 // pred_region
    _
  $region33: #{hnet_forward.1} parent=0 // pred_fallthru
    _
  // Predicated region
  $region34: #{hnet_forward.1} parent=0 // pred_check
    _
  $region35: #{hnet_forward.1} parent=0 // pred_check_branch
    %190 = sbr.rel (0) target = $region37
  $region36: #{hnet_forward.1} parent=0 // pred_region
    _
  $region37: #{hnet_forward.1} parent=0 // pred_fallthru
    _

</llo_original>
